<compile_context>
chip_gen: v7x
topology: tpu7x:2x2x1
jax: 0.10.0
libtpu: 0.0.40
codegen_flags: <defaults>
</compile_context>

<pallas_src>
import functools

import jax
import jax.numpy as jnp
from jax.experimental import pallas as pl
from jax.experimental.pallas import tpu as pltpu


def _deconv_in_relu_kernel(xw_ref, w_ref, b_ref, o_ref, y_scr,
                           *, s, kp, wq, hwq, d_h, eps, act,
                           count, need_mask, hq_valid, wq_valid):
    """Sub-pixel ConvTranspose2d + bias + InstanceNorm(train stats) + ReLU.

    One (sample, channel-tile) per grid step; all s*s output phases computed here so the
    per-(n, channel) statistics are complete within the step.

      xw_ref: (1, s, C_in*kp, Hp*Wq)      bf16  width-unfolded zero-padded input, one slab
                                                 per *width* phase (no dilation zeros)
      w_ref:  (s*s, kp, c_tile, C_in*kp)  bf16  per-(phase, height-tap) lhs
      b_ref:  (c_tile, 1)                 f32   bias
      o_ref:  (1, s*s, c_tile, Hq*Wq)     bf16  phase-major, lane-dense output
      y_scr:  (s*s, c_tile, Hq*Wq)        f32   pre-norm activations (scratch)
    """
    c_t = o_ref.shape[2]
    nphase = s * s
    bias = jnp.broadcast_to(b_ref[...], (c_t, hwq))        # hoisted once (broadcasts not CSE'd)

    if need_mask:
        # Only generated when H_out or W_out is not divisible by stride: some per-phase
        # rows/cols are out-of-range and must be excluded from the statistics.
        lin = jax.lax.broadcasted_iota(jnp.int32, (1, hwq), 1)
        row = lin // wq
        col = lin - row * wq
    masks = []

    # ---- pass 1: per-phase conv (kp height-tap MXU matmuls, f32 accumulation) + bias,
    #              store pre-norm activations, accumulate per-channel sums.
    total = jnp.zeros((c_t, 1), jnp.float32)
    for ph in range(s):
        for pw in range(s):
            phase = ph * s + pw
            acc = bias                                       # bias-initialized accumulator
            for r in range(kp):
                # Contiguous lane-slice of the (Hp, Wq)-flattened spatial axis.  (When
                # (d_h+r)*Wq is not a multiple of 128 Mosaic inserts a lane realignment;
                # padding Wq up to 128 would inflate HBM bytes, so we accept the XLU cost.)
                start = (d_h[ph] + r) * wq
                win = xw_ref[0, pw, :, pl.ds(start, hwq)]    # (C_in*kp, hwq) bf16
                acc = acc + jnp.dot(w_ref[phase, r], win,
                                    preferred_element_type=jnp.float32)
            y_scr[phase] = acc
            if need_mask:
                m = (row < hq_valid[ph]) & (col < wq_valid[pw])
                masks.append(m)
                acc = jnp.where(m, acc, 0.0)
            total = total + jnp.sum(acc, axis=1, keepdims=True)

    inv_n = 1.0 / count
    mean = total * inv_n                                     # (c_t, 1)

    # ---- pass 2: centered sum of squares (two-pass form, no E[y^2]-E[y]^2 cancellation).
    ssq = jnp.zeros((c_t, 1), jnp.float32)
    for phase in range(nphase):
        yc = y_scr[phase] - mean
        if need_mask:
            yc = jnp.where(masks[phase], yc, 0.0)
        ssq = ssq + jnp.sum(yc * yc, axis=1, keepdims=True)
    inv_std = jax.lax.rsqrt(ssq * inv_n + eps)               # biased variance, eps inside

    # ---- pass 3: normalize (+ReLU), emit bf16 phase-major output.
    for phase in range(nphase):
        y = (y_scr[phase] - mean) * inv_std
        if act:
            y = jnp.maximum(y, 0.0)
        o_ref[0, phase] = y.astype(o_ref.dtype)


def _tile_bytes(shape, itemsize):
    """Rough per-block VMEM footprint, last two dims padded to an (8, 128) tile."""
    lead = 1
    for d in shape[:-2]:
        lead *= int(d)
    sub = -(-int(shape[-2]) // 8) * 8
    lane = -(-int(shape[-1]) // 128) * 128
    return lead * sub * lane * itemsize


def _vmem_cap_bytes():
    """Generation-aware VMEM budget: ~3/4 of physical (48 MiB on v7x, 96 MiB on v5e/v6e)."""
    phys = None
    try:
        phys = getattr(pltpu.get_tpu_info(), "vmem_capacity_bytes", None)
    except Exception:
        phys = None
    if not phys:
        phys = 64 * 2 ** 20            # conservative (v7x-sized) fallback
    return max(32 * 2 ** 20, (int(phys) * 3) // 4)


def deconv_block(x, weight, bias, *, stride, padding, output_padding,
                 act=True, eps=1e-5, out_dtype=jnp.bfloat16):
    """ConvTranspose2d + InstanceNorm2d(train-mode) + ReLU.  NCHW in / NCHW out (bf16).

    x:      (N, C_in, H, W)
    weight: (C_in, C_out, K, K)   -- PyTorch ConvTranspose2d layout
    bias:   (C_out,)
    """
    N, C_in, H, W = x.shape
    wc_in, C_out, K, K2 = weight.shape
    assert wc_in == C_in and K2 == K, "weight must be (C_in, C_out, K, K)"
    s, p, op = int(stride), int(padding), int(output_padding)
    if s < 1 or p < 0:
        raise ValueError("stride must be >= 1 and padding >= 0")
    if not (0 <= op < s):
        raise ValueError("PyTorch requires 0 <= output_padding < stride")
    H_out = (H - 1) * s - 2 * p + K + op
    W_out = (W - 1) * s - 2 * p + K + op
    if H_out <= 0 or W_out <= 0:
        raise ValueError("non-positive output size for the given parameters")

    # ---- sub-pixel geometry -------------------------------------------------------------
    kp = -(-K // s)                      # taps per output phase (per dim) = ceil(K/stride)
    Hq = -(-H_out // s)                  # per-phase rows/cols computed (padded to max phase)
    Wq = -(-W_out // s)
    d_max = (s - 1 + p) // s
    d_h = tuple((ph + p) // s for ph in range(s))
    d_w = tuple((pw + p) // s for pw in range(s))
    pad_lo = kp - 1
    pad_hi_h = max(0, Hq + d_max - H)
    pad_hi_w = max(0, Wq + d_max - W)
    Hp = H + pad_lo + pad_hi_h

    # ---- layout glue: zero-pad the UN-DILATED input (no stride^2 zeros), then unfold only
    # the width taps, one slab per width phase.
    #   xw[n, pw, ci*kp + u, h*Wq + qw] = xp[n, ci, h, qw + d_w[pw] + u]
    xp = jnp.pad(x, ((0, 0), (0, 0), (pad_lo, pad_hi_h), (pad_lo, pad_hi_w)))
    slabs = []
    for pw in range(s):
        taps = [xp[:, :, :, d_w[pw] + u: d_w[pw] + u + Wq] for u in range(kp)]
        slabs.append(jnp.stack(taps, axis=2))                # (N, C_in, kp, Hp, Wq)
    xw = jnp.stack(slabs, axis=1).reshape(N, s, C_in * kp, Hp * Wq).astype(jnp.bfloat16)

    # ---- per-(phase, height-tap) lhs weights:
    #   w_taps[ph*s+pw, r, co, ci*kp+u] = weight[ci, co, (kp-1-r)*s + (ph+p)%s,
    #                                                     (kp-1-u)*s + (pw+p)%s]
    # (zero where the reconstructed tap index exceeds K-1).
    w_taps = jnp.zeros((s * s, kp, C_out, C_in, kp), weight.dtype)
    for ph in range(s):
        mh = (ph + p) % s
        for pw in range(s):
            mw = (pw + p) % s
            for r in range(kp):
                kh = (kp - 1 - r) * s + mh
                if kh >= K:
                    continue
                for u in range(kp):
                    kw = (kp - 1 - u) * s + mw
                    if kw >= K:
                        continue
                    w_taps = w_taps.at[ph * s + pw, r, :, :, u].set(weight[:, :, kh, kw].T)
    w_taps = w_taps.reshape(s * s, kp, C_out, C_in * kp).astype(jnp.bfloat16)
    b_mat = bias.reshape(C_out, 1).astype(jnp.float32)

    HWq = Hq * Wq
    CKp = C_in * kp
    nphase = s * s

    # ---- channel tiling: InstanceNorm stats are per (n, channel) so channel tiles are
    # fully independent; small tiles also give each TensorCore multiple steps to pipeline.
    c_tile = C_out
    if C_out > 64:
        for cand in (64, 32, 16, 8):
            if C_out % cand == 0:
                c_tile = cand
                break
    n_ct = C_out // c_tile

    est = (2 * (_tile_bytes((1, s, CKp, Hp * Wq), 2)
                + _tile_bytes((nphase, kp, c_tile, CKp), 2)
                + _tile_bytes((c_tile, 1), 4)
                + _tile_bytes((1, nphase, c_tile, HWq), 2))
           + _tile_bytes((nphase, c_tile, HWq), 4))
    vmem_limit = int(min(_vmem_cap_bytes(), max(32 * 2 ** 20, 2 * est)))

    need_mask = (Hq * s != H_out) or (Wq * s != W_out)
    hq_valid = tuple(-(-(H_out - ph) // s) for ph in range(s))
    wq_valid = tuple(-(-(W_out - pw) // s) for pw in range(s))

    kernel = functools.partial(
        _deconv_in_relu_kernel,
        s=s, kp=kp, wq=Wq, hwq=HWq, d_h=d_h, eps=eps, act=act,
        count=float(H_out * W_out), need_mask=need_mask,
        hq_valid=hq_valid, wq_valid=wq_valid)

    out_flat = pl.pallas_call(
        kernel,
        out_shape=jax.ShapeDtypeStruct((N, nphase, C_out, HWq), jnp.bfloat16),
        grid_spec=pltpu.PrefetchScalarGridSpec(
            num_scalar_prefetch=0,
            # Channel tiles innermost: the xw block index is unchanged across them, so the
            # (large) input slab is fetched once per sample while outputs/weights stream.
            grid=(N, n_ct),
            in_specs=[
                pl.BlockSpec((1, s, CKp, Hp * Wq), lambda n, j: (n, 0, 0, 0)),
                pl.BlockSpec((nphase, kp, c_tile, CKp), lambda n, j: (0, 0, j, 0)),
                pl.BlockSpec((c_tile, 1), lambda n, j: (j, 0)),
            ],
            out_specs=pl.BlockSpec((1, nphase, c_tile, HWq), lambda n, j: (n, 0, j, 0)),
            scratch_shapes=[pltpu.VMEM((nphase, c_tile, HWq), jnp.float32)],
        ),
        compiler_params=pltpu.CompilerParams(
            dimension_semantics=("parallel", "parallel"),    # megacore sharding on v7x
            vmem_limit_bytes=vmem_limit,
        ),
    )(xw, w_taps, b_mat)

    # Pixel-shuffle the phase-major kernel output back to NCHW (one fused XLA transpose on
    # bf16): out[n, c, qh*s+ph, qw*s+pw] = out_flat[n, ph*s+pw, c, qh*Wq+qw].
    out = out_flat.reshape(N, s, s, C_out, Hq, Wq)
    out = jnp.transpose(out, (0, 3, 4, 1, 5, 2)).reshape(N, C_out, Hq * s, Wq * s)
    return out[:, :, :H_out, :W_out].astype(out_dtype)


def _reference(x, weight, bias, *, stride, padding, output_padding, act, eps=1e-5):
    """Pure-JAX reference mirroring the PyTorch forward (training-mode InstanceNorm).

    Inputs are quantized to bf16 exactly like the kernel path so the comparison isolates
    implementation error from bf16 input rounding.
    """
    _, _, K, _ = weight.shape
    xq = x.astype(jnp.bfloat16).astype(jnp.float32)
    wq = weight.astype(jnp.bfloat16).astype(jnp.float32)
    w_conv = jnp.transpose(wq, (1, 0, 2, 3))[:, :, ::-1, ::-1]   # OIHW, flipped
    y = jax.lax.conv_general_dilated(
        xq, w_conv,
        window_strides=(1, 1),
        padding=[(K - 1 - padding, K - 1 - padding + output_padding)] * 2,
        lhs_dilation=(stride, stride),
        dimension_numbers=("NCHW", "OIHW", "NCHW"),
        precision=jax.lax.Precision.HIGHEST,
    ) + bias[None, :, None, None]
    mean = y.mean(axis=(2, 3), keepdims=True)
    var = ((y - mean) ** 2).mean(axis=(2, 3), keepdims=True)      # biased
    y = (y - mean) / jnp.sqrt(var + eps)
    if act:
        y = jnp.maximum(y, 0.0)
    return y


if __name__ == "__main__":
    # Small decoder-style shapes: (N, C_in, H, W) -> (N, C_out, 2H, 2W)
    N, C_in, H, W = 2, 4, 16, 16
    C_out, K, stride, padding, out_padding = 8, 3, 2, 1, 1        # -> 32x32 output

    key = jax.random.PRNGKey(0)
    kx, kw, kb = jax.random.split(key, 3)
    x = jax.random.normal(kx, (N, C_in, H, W), dtype=jnp.float32)
    # nn.init.normal_(weight, 0.0, 0.02); PyTorch-default uniform-ish bias init.
    weight = 0.02 * jax.random.normal(kw, (C_in, C_out, K, K), dtype=jnp.float32)
    bound = 1.0 / (C_in * K * K) ** 0.5
    bias = jax.random.uniform(kb, (C_out,), minval=-bound, maxval=bound,
                              dtype=jnp.float32)

    fwd = jax.jit(functools.partial(deconv_block, stride=stride, padding=padding,
                                    output_padding=out_padding, act=True))
    out = jax.block_until_ready(fwd(x, weight, bias))

    ref = _reference(x, weight, bias, stride=stride, padding=padding,
                     output_padding=out_padding, act=True)

    H_ref = (H - 1) * stride - 2 * padding + K + out_padding
    assert out.shape == (N, C_out, H_ref, H_ref), out.shape
    out_f32 = out.astype(jnp.float32)
    max_err = float(jnp.max(jnp.abs(out_f32 - ref)))
    # Kernel emits bf16 (per perf review); tolerance covers one bf16 rounding of the
    # normalized activations on top of the bf16-quantized-input reference.
    assert jnp.allclose(out_f32, ref, atol=2e-3, rtol=8e-3), max_err
    print("KERNEL_OK")
</pallas_src>

<mosaic_0001>
module attributes {stable_mosaic.version = 11 : i64} {
  func.func @_deconv_in_relu_kernel(%arg0: i32, %arg1: i32, %arg2: memref<1x2x8x288xbf16, #tpu.memory_space<vmem>>, %arg3: memref<4x2x8x8xbf16, #tpu.memory_space<vmem>>, %arg4: memref<8x1xf32, #tpu.memory_space<vmem>>, %arg5: memref<1x4x8x256xbf16, #tpu.memory_space<vmem>>, %arg6: memref<4x8x256xf32, #tpu.memory_space<vmem>>) attributes {dimension_semantics = [#tpu.dimension_semantics<parallel>, #tpu.dimension_semantics<parallel>], iteration_bounds = array<i64: 2, 1>, scalar_prefetch = 0 : i64, scratch_operands = 1 : i64, tpu.core_type = #tpu.core_type<tc>, window_params = [{transform_indices = @transform_0, window_bounds = array<i64: 1, 2, 8, 288>}, {transform_indices = @transform_1, window_bounds = array<i64: 4, 2, 8, 8>}, {transform_indices = @transform_2, window_bounds = array<i64: 8, 1>}, {transform_indices = @transform_3, window_bounds = array<i64: 1, 4, 8, 256>}]} {
    %c0 = arith.constant 0 : index
    %c0_0 = arith.constant 0 : index
    %0 = vector.load %arg4[%c0, %c0_0] : memref<8x1xf32, #tpu.memory_space<vmem>>, vector<8x1xf32>
    %1 = vector.shape_cast %0 : vector<8x1xf32> to vector<8x1xf32>
    %2 = vector.broadcast %1 : vector<8x1xf32> to vector<8x256xf32>
    %cst = arith.constant 0.000000e+00 : f32
    %3 = vector.broadcast %cst : f32 to vector<8x1xf32>
    %c0_1 = arith.constant 0 : index
    %c0_2 = arith.constant 0 : index
    %c0_3 = arith.constant 0 : index
    %c0_4 = arith.constant 0 : index
    %4 = vector.load %arg2[%c0_1, %c0_2, %c0_3, %c0_4] : memref<1x2x8x288xbf16, #tpu.memory_space<vmem>>, vector<1x1x8x256xbf16>
    %5 = vector.shape_cast %4 : vector<1x1x8x256xbf16> to vector<8x256xbf16>
    %c0_5 = arith.constant 0 : index
    %c0_6 = arith.constant 0 : index
    %c0_7 = arith.constant 0 : index
    %c0_8 = arith.constant 0 : index
    %6 = vector.load %arg3[%c0_5, %c0_6, %c0_7, %c0_8] : memref<4x2x8x8xbf16, #tpu.memory_space<vmem>>, vector<1x1x8x8xbf16>
    %7 = vector.shape_cast %6 : vector<1x1x8x8xbf16> to vector<8x8xbf16>
    %cst_9 = arith.constant dense<0.000000e+00> : vector<8x256xf32>
    %8 = tpu.matmul %7, %5, %cst_9 {dimension_numbers = #tpu.dot_dimension_numbers<[1], [0], [0], [1], [0, 0, 1, 1], [], []>} : vector<8x8xbf16>, vector<8x256xbf16>, vector<8x256xf32> -> vector<8x256xf32>
    %9 = arith.addf %2, %8 : vector<8x256xf32>
    %c0_10 = arith.constant 0 : index
    %c0_11 = arith.constant 0 : index
    %c0_12 = arith.constant 0 : index
    %c16 = arith.constant 16 : index
    %10 = vector.load %arg2[%c0_10, %c0_11, %c0_12, %c16] : memref<1x2x8x288xbf16, #tpu.memory_space<vmem>>, vector<1x1x8x256xbf16>
    %11 = vector.shape_cast %10 : vector<1x1x8x256xbf16> to vector<8x256xbf16>
    %c0_13 = arith.constant 0 : index
    %c1 = arith.constant 1 : index
    %c0_14 = arith.constant 0 : index
    %c0_15 = arith.constant 0 : index
    %12 = vector.load %arg3[%c0_13, %c1, %c0_14, %c0_15] : memref<4x2x8x8xbf16, #tpu.memory_space<vmem>>, vector<1x1x8x8xbf16>
    %13 = vector.shape_cast %12 : vector<1x1x8x8xbf16> to vector<8x8xbf16>
    %cst_16 = arith.constant dense<0.000000e+00> : vector<8x256xf32>
    %14 = tpu.matmul %13, %11, %cst_16 {dimension_numbers = #tpu.dot_dimension_numbers<[1], [0], [0], [1], [0, 0, 1, 1], [], []>} : vector<8x8xbf16>, vector<8x256xbf16>, vector<8x256xf32> -> vector<8x256xf32>
    %15 = arith.addf %9, %14 : vector<8x256xf32>
    %c0_17 = arith.constant 0 : index
    %c0_18 = arith.constant 0 : index
    %c0_19 = arith.constant 0 : index
    %16 = vector.load %arg6[%c0_17, %c0_18, %c0_19] : memref<4x8x256xf32, #tpu.memory_space<vmem>>, vector<1x8x256xf32>
    %17 = vector.shape_cast %16 : vector<1x8x256xf32> to vector<8x256xf32>
    %18 = vector.shape_cast %15 : vector<8x256xf32> to vector<1x8x256xf32>
    tpu.vector_store %arg6[%c0_17, %c0_18, %c0_19], %18 {strides = array<i32>} : memref<4x8x256xf32, #tpu.memory_space<vmem>>, vector<1x8x256xf32>,
    %cst_20 = arith.constant dense<0.000000e+00> : vector<8xf32>
    %19 = vector.multi_reduction <add>, %15, %cst_20 [1] : vector<8x256xf32> to vector<8xf32>
    %20 = vector.shape_cast %19 : vector<8xf32> to vector<8x1xf32>
    %21 = arith.addf %3, %20 : vector<8x1xf32>
    %c0_21 = arith.constant 0 : index
    %c1_22 = arith.constant 1 : index
    %c0_23 = arith.constant 0 : index
    %c0_24 = arith.constant 0 : index
    %22 = vector.load %arg2[%c0_21, %c1_22, %c0_23, %c0_24] : memref<1x2x8x288xbf16, #tpu.memory_space<vmem>>, vector<1x1x8x256xbf16>
    %23 = vector.shape_cast %22 : vector<1x1x8x256xbf16> to vector<8x256xbf16>
    %c1_25 = arith.constant 1 : index
    %c0_26 = arith.constant 0 : index
    %c0_27 = arith.constant 0 : index
    %c0_28 = arith.constant 0 : index
    %24 = vector.load %arg3[%c1_25, %c0_26, %c0_27, %c0_28] : memref<4x2x8x8xbf16, #tpu.memory_space<vmem>>, vector<1x1x8x8xbf16>
    %25 = vector.shape_cast %24 : vector<1x1x8x8xbf16> to vector<8x8xbf16>
    %cst_29 = arith.constant dense<0.000000e+00> : vector<8x256xf32>
    %26 = tpu.matmul %25, %23, %cst_29 {dimension_numbers = #tpu.dot_dimension_numbers<[1], [0], [0], [1], [0, 0, 1, 1], [], []>} : vector<8x8xbf16>, vector<8x256xbf16>, vector<8x256xf32> -> vector<8x256xf32>
    %27 = arith.addf %2, %26 : vector<8x256xf32>
    %c0_30 = arith.constant 0 : index
    %c1_31 = arith.constant 1 : index
    %c0_32 = arith.constant 0 : index
    %c16_33 = arith.constant 16 : index
    %28 = vector.load %arg2[%c0_30, %c1_31, %c0_32, %c16_33] : memref<1x2x8x288xbf16, #tpu.memory_space<vmem>>, vector<1x1x8x256xbf16>
    %29 = vector.shape_cast %28 : vector<1x1x8x256xbf16> to vector<8x256xbf16>
    %c1_34 = arith.constant 1 : index
    %c1_35 = arith.constant 1 : index
    %c0_36 = arith.constant 0 : index
    %c0_37 = arith.constant 0 : index
    %30 = vector.load %arg3[%c1_34, %c1_35, %c0_36, %c0_37] : memref<4x2x8x8xbf16, #tpu.memory_space<vmem>>, vector<1x1x8x8xbf16>
    %31 = vector.shape_cast %30 : vector<1x1x8x8xbf16> to vector<8x8xbf16>
    %cst_38 = arith.constant dense<0.000000e+00> : vector<8x256xf32>
    %32 = tpu.matmul %31, %29, %cst_38 {dimension_numbers = #tpu.dot_dimension_numbers<[1], [0], [0], [1], [0, 0, 1, 1], [], []>} : vector<8x8xbf16>, vector<8x256xbf16>, vector<8x256xf32> -> vector<8x256xf32>
    %33 = arith.addf %27, %32 : vector<8x256xf32>
    %c1_39 = arith.constant 1 : index
    %c0_40 = arith.constant 0 : index
    %c0_41 = arith.constant 0 : index
    %34 = vector.load %arg6[%c1_39, %c0_40, %c0_41] : memref<4x8x256xf32, #tpu.memory_space<vmem>>, vector<1x8x256xf32>
    %35 = vector.shape_cast %34 : vector<1x8x256xf32> to vector<8x256xf32>
    %36 = vector.shape_cast %33 : vector<8x256xf32> to vector<1x8x256xf32>
    tpu.vector_store %arg6[%c1_39, %c0_40, %c0_41], %36 {strides = array<i32>} : memref<4x8x256xf32, #tpu.memory_space<vmem>>, vector<1x8x256xf32>,
    %cst_42 = arith.constant dense<0.000000e+00> : vector<8xf32>
    %37 = vector.multi_reduction <add>, %33, %cst_42 [1] : vector<8x256xf32> to vector<8xf32>
    %38 = vector.shape_cast %37 : vector<8xf32> to vector<8x1xf32>
    %39 = arith.addf %21, %38 : vector<8x1xf32>
    %c0_43 = arith.constant 0 : index
    %c0_44 = arith.constant 0 : index
    %c0_45 = arith.constant 0 : index
    %c16_46 = arith.constant 16 : index
    %40 = vector.load %arg2[%c0_43, %c0_44, %c0_45, %c16_46] : memref<1x2x8x288xbf16, #tpu.memory_space<vmem>>, vector<1x1x8x256xbf16>
    %41 = vector.shape_cast %40 : vector<1x1x8x256xbf16> to vector<8x256xbf16>
    %c2 = arith.constant 2 : index
    %c0_47 = arith.constant 0 : index
    %c0_48 = arith.constant 0 : index
    %c0_49 = arith.constant 0 : index
    %42 = vector.load %arg3[%c2, %c0_47, %c0_48, %c0_49] : memref<4x2x8x8xbf16, #tpu.memory_space<vmem>>, vector<1x1x8x8xbf16>
    %43 = vector.shape_cast %42 : vector<1x1x8x8xbf16> to vector<8x8xbf16>
    %cst_50 = arith.constant dense<0.000000e+00> : vector<8x256xf32>
    %44 = tpu.matmul %43, %41, %cst_50 {dimension_numbers = #tpu.dot_dimension_numbers<[1], [0], [0], [1], [0, 0, 1, 1], [], []>} : vector<8x8xbf16>, vector<8x256xbf16>, vector<8x256xf32> -> vector<8x256xf32>
    %45 = arith.addf %2, %44 : vector<8x256xf32>
    %c0_51 = arith.constant 0 : index
    %c0_52 = arith.constant 0 : index
    %c0_53 = arith.constant 0 : index
    %c32 = arith.constant 32 : index
    %46 = vector.load %arg2[%c0_51, %c0_52, %c0_53, %c32] : memref<1x2x8x288xbf16, #tpu.memory_space<vmem>>, vector<1x1x8x256xbf16>
    %47 = vector.shape_cast %46 : vector<1x1x8x256xbf16> to vector<8x256xbf16>
    %c2_54 = arith.constant 2 : index
    %c1_55 = arith.constant 1 : index
    %c0_56 = arith.constant 0 : index
    %c0_57 = arith.constant 0 : index
    %48 = vector.load %arg3[%c2_54, %c1_55, %c0_56, %c0_57] : memref<4x2x8x8xbf16, #tpu.memory_space<vmem>>, vector<1x1x8x8xbf16>
    %49 = vector.shape_cast %48 : vector<1x1x8x8xbf16> to vector<8x8xbf16>
    %cst_58 = arith.constant dense<0.000000e+00> : vector<8x256xf32>
    %50 = tpu.matmul %49, %47, %cst_58 {dimension_numbers = #tpu.dot_dimension_numbers<[1], [0], [0], [1], [0, 0, 1, 1], [], []>} : vector<8x8xbf16>, vector<8x256xbf16>, vector<8x256xf32> -> vector<8x256xf32>
    %51 = arith.addf %45, %50 : vector<8x256xf32>
    %c2_59 = arith.constant 2 : index
    %c0_60 = arith.constant 0 : index
    %c0_61 = arith.constant 0 : index
    %52 = vector.load %arg6[%c2_59, %c0_60, %c0_61] : memref<4x8x256xf32, #tpu.memory_space<vmem>>, vector<1x8x256xf32>
    %53 = vector.shape_cast %52 : vector<1x8x256xf32> to vector<8x256xf32>
    %54 = vector.shape_cast %51 : vector<8x256xf32> to vector<1x8x256xf32>
    tpu.vector_store %arg6[%c2_59, %c0_60, %c0_61], %54 {strides = array<i32>} : memref<4x8x256xf32, #tpu.memory_space<vmem>>, vector<1x8x256xf32>,
    %cst_62 = arith.constant dense<0.000000e+00> : vector<8xf32>
    %55 = vector.multi_reduction <add>, %51, %cst_62 [1] : vector<8x256xf32> to vector<8xf32>
    %56 = vector.shape_cast %55 : vector<8xf32> to vector<8x1xf32>
    %57 = arith.addf %39, %56 : vector<8x1xf32>
    %c0_63 = arith.constant 0 : index
    %c1_64 = arith.constant 1 : index
    %c0_65 = arith.constant 0 : index
    %c16_66 = arith.constant 16 : index
    %58 = vector.load %arg2[%c0_63, %c1_64, %c0_65, %c16_66] : memref<1x2x8x288xbf16, #tpu.memory_space<vmem>>, vector<1x1x8x256xbf16>
    %59 = vector.shape_cast %58 : vector<1x1x8x256xbf16> to vector<8x256xbf16>
    %c3 = arith.constant 3 : index
    %c0_67 = arith.constant 0 : index
    %c0_68 = arith.constant 0 : index
    %c0_69 = arith.constant 0 : index
    %60 = vector.load %arg3[%c3, %c0_67, %c0_68, %c0_69] : memref<4x2x8x8xbf16, #tpu.memory_space<vmem>>, vector<1x1x8x8xbf16>
    %61 = vector.shape_cast %60 : vector<1x1x8x8xbf16> to vector<8x8xbf16>
    %cst_70 = arith.constant dense<0.000000e+00> : vector<8x256xf32>
    %62 = tpu.matmul %61, %59, %cst_70 {dimension_numbers = #tpu.dot_dimension_numbers<[1], [0], [0], [1], [0, 0, 1, 1], [], []>} : vector<8x8xbf16>, vector<8x256xbf16>, vector<8x256xf32> -> vector<8x256xf32>
    %63 = arith.addf %2, %62 : vector<8x256xf32>
    %c0_71 = arith.constant 0 : index
    %c1_72 = arith.constant 1 : index
    %c0_73 = arith.constant 0 : index
    %c32_74 = arith.constant 32 : index
    %64 = vector.load %arg2[%c0_71, %c1_72, %c0_73, %c32_74] : memref<1x2x8x288xbf16, #tpu.memory_space<vmem>>, vector<1x1x8x256xbf16>
    %65 = vector.shape_cast %64 : vector<1x1x8x256xbf16> to vector<8x256xbf16>
    %c3_75 = arith.constant 3 : index
    %c1_76 = arith.constant 1 : index
    %c0_77 = arith.constant 0 : index
    %c0_78 = arith.constant 0 : index
    %66 = vector.load %arg3[%c3_75, %c1_76, %c0_77, %c0_78] : memref<4x2x8x8xbf16, #tpu.memory_space<vmem>>, vector<1x1x8x8xbf16>
    %67 = vector.shape_cast %66 : vector<1x1x8x8xbf16> to vector<8x8xbf16>
    %cst_79 = arith.constant dense<0.000000e+00> : vector<8x256xf32>
    %68 = tpu.matmul %67, %65, %cst_79 {dimension_numbers = #tpu.dot_dimension_numbers<[1], [0], [0], [1], [0, 0, 1, 1], [], []>} : vector<8x8xbf16>, vector<8x256xbf16>, vector<8x256xf32> -> vector<8x256xf32>
    %69 = arith.addf %63, %68 : vector<8x256xf32>
    %c3_80 = arith.constant 3 : index
    %c0_81 = arith.constant 0 : index
    %c0_82 = arith.constant 0 : index
    %70 = vector.load %arg6[%c3_80, %c0_81, %c0_82] : memref<4x8x256xf32, #tpu.memory_space<vmem>>, vector<1x8x256xf32>
    %71 = vector.shape_cast %70 : vector<1x8x256xf32> to vector<8x256xf32>
    %72 = vector.shape_cast %69 : vector<8x256xf32> to vector<1x8x256xf32>
    tpu.vector_store %arg6[%c3_80, %c0_81, %c0_82], %72 {strides = array<i32>} : memref<4x8x256xf32, #tpu.memory_space<vmem>>, vector<1x8x256xf32>,
    %cst_83 = arith.constant dense<0.000000e+00> : vector<8xf32>
    %73 = vector.multi_reduction <add>, %69, %cst_83 [1] : vector<8x256xf32> to vector<8xf32>
    %74 = vector.shape_cast %73 : vector<8xf32> to vector<8x1xf32>
    %75 = arith.addf %57, %74 : vector<8x1xf32>
    %cst_84 = arith.constant 9.765625E-4 : f32
    %76 = vector.broadcast %cst_84 : f32 to vector<8x1xf32>
    %77 = arith.mulf %75, %76 : vector<8x1xf32>
    %cst_85 = arith.constant 0.000000e+00 : f32
    %78 = vector.broadcast %cst_85 : f32 to vector<8x1xf32>
    %c0_86 = arith.constant 0 : index
    %c0_87 = arith.constant 0 : index
    %c0_88 = arith.constant 0 : index
    %79 = vector.load %arg6[%c0_86, %c0_87, %c0_88] : memref<4x8x256xf32, #tpu.memory_space<vmem>>, vector<1x8x256xf32>
    %80 = vector.shape_cast %79 : vector<1x8x256xf32> to vector<8x256xf32>
    %81 = vector.broadcast %77 : vector<8x1xf32> to vector<8x256xf32>
    %82 = arith.subf %80, %81 : vector<8x256xf32>
    %83 = arith.mulf %82, %82 : vector<8x256xf32>
    %cst_89 = arith.constant dense<0.000000e+00> : vector<8xf32>
    %84 = vector.multi_reduction <add>, %83, %cst_89 [1] : vector<8x256xf32> to vector<8xf32>
    %85 = vector.shape_cast %84 : vector<8xf32> to vector<8x1xf32>
    %86 = arith.addf %78, %85 : vector<8x1xf32>
    %c1_90 = arith.constant 1 : index
    %c0_91 = arith.constant 0 : index
    %c0_92 = arith.constant 0 : index
    %87 = vector.load %arg6[%c1_90, %c0_91, %c0_92] : memref<4x8x256xf32, #tpu.memory_space<vmem>>, vector<1x8x256xf32>
    %88 = vector.shape_cast %87 : vector<1x8x256xf32> to vector<8x256xf32>
    %89 = vector.broadcast %77 : vector<8x1xf32> to vector<8x256xf32>
    %90 = arith.subf %88, %89 : vector<8x256xf32>
    %91 = arith.mulf %90, %90 : vector<8x256xf32>
    %cst_93 = arith.constant dense<0.000000e+00> : vector<8xf32>
    %92 = vector.multi_reduction <add>, %91, %cst_93 [1] : vector<8x256xf32> to vector<8xf32>
    %93 = vector.shape_cast %92 : vector<8xf32> to vector<8x1xf32>
    %94 = arith.addf %86, %93 : vector<8x1xf32>
    %c2_94 = arith.constant 2 : index
    %c0_95 = arith.constant 0 : index
    %c0_96 = arith.constant 0 : index
    %95 = vector.load %arg6[%c2_94, %c0_95, %c0_96] : memref<4x8x256xf32, #tpu.memory_space<vmem>>, vector<1x8x256xf32>
    %96 = vector.shape_cast %95 : vector<1x8x256xf32> to vector<8x256xf32>
    %97 = vector.broadcast %77 : vector<8x1xf32> to vector<8x256xf32>
    %98 = arith.subf %96, %97 : vector<8x256xf32>
    %99 = arith.mulf %98, %98 : vector<8x256xf32>
    %cst_97 = arith.constant dense<0.000000e+00> : vector<8xf32>
    %100 = vector.multi_reduction <add>, %99, %cst_97 [1] : vector<8x256xf32> to vector<8xf32>
    %101 = vector.shape_cast %100 : vector<8xf32> to vector<8x1xf32>
    %102 = arith.addf %94, %101 : vector<8x1xf32>
    %c3_98 = arith.constant 3 : index
    %c0_99 = arith.constant 0 : index
    %c0_100 = arith.constant 0 : index
    %103 = vector.load %arg6[%c3_98, %c0_99, %c0_100] : memref<4x8x256xf32, #tpu.memory_space<vmem>>, vector<1x8x256xf32>
    %104 = vector.shape_cast %103 : vector<1x8x256xf32> to vector<8x256xf32>
    %105 = vector.broadcast %77 : vector<8x1xf32> to vector<8x256xf32>
    %106 = arith.subf %104, %105 : vector<8x256xf32>
    %107 = arith.mulf %106, %106 : vector<8x256xf32>
    %cst_101 = arith.constant dense<0.000000e+00> : vector<8xf32>
    %108 = vector.multi_reduction <add>, %107, %cst_101 [1] : vector<8x256xf32> to vector<8xf32>
    %109 = vector.shape_cast %108 : vector<8xf32> to vector<8x1xf32>
    %110 = arith.addf %102, %109 : vector<8x1xf32>
    %cst_102 = arith.constant 9.765625E-4 : f32
    %111 = vector.broadcast %cst_102 : f32 to vector<8x1xf32>
    %112 = arith.mulf %110, %111 : vector<8x1xf32>
    %cst_103 = arith.constant 9.99999974E-6 : f32
    %113 = vector.broadcast %cst_103 : f32 to vector<8x1xf32>
    %114 = arith.addf %112, %113 : vector<8x1xf32>
    %115 = math.rsqrt %114 : vector<8x1xf32>
    %c0_104 = arith.constant 0 : index
    %c0_105 = arith.constant 0 : index
    %c0_106 = arith.constant 0 : index
    %116 = vector.load %arg6[%c0_104, %c0_105, %c0_106] : memref<4x8x256xf32, #tpu.memory_space<vmem>>, vector<1x8x256xf32>
    %117 = vector.shape_cast %116 : vector<1x8x256xf32> to vector<8x256xf32>
    %118 = vector.broadcast %77 : vector<8x1xf32> to vector<8x256xf32>
    %119 = arith.subf %117, %118 : vector<8x256xf32>
    %120 = vector.broadcast %115 : vector<8x1xf32> to vector<8x256xf32>
    %121 = arith.mulf %119, %120 : vector<8x256xf32>
    %cst_107 = arith.constant 0.000000e+00 : f32
    %122 = vector.broadcast %cst_107 : f32 to vector<8x256xf32>
    %123 = arith.maximumf %121, %122 : vector<8x256xf32>
    %124 = arith.truncf %123 : vector<8x256xf32> to vector<8x256xbf16>
    %c0_108 = arith.constant 0 : index
    %c0_109 = arith.constant 0 : index
    %c0_110 = arith.constant 0 : index
    %c0_111 = arith.constant 0 : index
    %125 = vector.load %arg5[%c0_108, %c0_109, %c0_110, %c0_111] : memref<1x4x8x256xbf16, #tpu.memory_space<vmem>>, vector<1x1x8x256xbf16>
    %126 = vector.shape_cast %125 : vector<1x1x8x256xbf16> to vector<8x256xbf16>
    %127 = vector.shape_cast %124 : vector<8x256xbf16> to vector<1x1x8x256xbf16>
    tpu.vector_store %arg5[%c0_108, %c0_109, %c0_110, %c0_111], %127 {strides = array<i32>} : memref<1x4x8x256xbf16, #tpu.memory_space<vmem>>, vector<1x1x8x256xbf16>,
    %c1_112 = arith.constant 1 : index
    %c0_113 = arith.constant 0 : index
    %c0_114 = arith.constant 0 : index
    %128 = vector.load %arg6[%c1_112, %c0_113, %c0_114] : memref<4x8x256xf32, #tpu.memory_space<vmem>>, vector<1x8x256xf32>
    %129 = vector.shape_cast %128 : vector<1x8x256xf32> to vector<8x256xf32>
    %130 = vector.broadcast %77 : vector<8x1xf32> to vector<8x256xf32>
    %131 = arith.subf %129, %130 : vector<8x256xf32>
    %132 = vector.broadcast %115 : vector<8x1xf32> to vector<8x256xf32>
    %133 = arith.mulf %131, %132 : vector<8x256xf32>
    %cst_115 = arith.constant 0.000000e+00 : f32
    %134 = vector.broadcast %cst_115 : f32 to vector<8x256xf32>
    %135 = arith.maximumf %133, %134 : vector<8x256xf32>
    %136 = arith.truncf %135 : vector<8x256xf32> to vector<8x256xbf16>
    %c0_116 = arith.constant 0 : index
    %c1_117 = arith.constant 1 : index
    %c0_118 = arith.constant 0 : index
    %c0_119 = arith.constant 0 : index
    %137 = vector.load %arg5[%c0_116, %c1_117, %c0_118, %c0_119] : memref<1x4x8x256xbf16, #tpu.memory_space<vmem>>, vector<1x1x8x256xbf16>
    %138 = vector.shape_cast %137 : vector<1x1x8x256xbf16> to vector<8x256xbf16>
    %139 = vector.shape_cast %136 : vector<8x256xbf16> to vector<1x1x8x256xbf16>
    tpu.vector_store %arg5[%c0_116, %c1_117, %c0_118, %c0_119], %139 {strides = array<i32>} : memref<1x4x8x256xbf16, #tpu.memory_space<vmem>>, vector<1x1x8x256xbf16>,
    %c2_120 = arith.constant 2 : index
    %c0_121 = arith.constant 0 : index
    %c0_122 = arith.constant 0 : index
    %140 = vector.load %arg6[%c2_120, %c0_121, %c0_122] : memref<4x8x256xf32, #tpu.memory_space<vmem>>, vector<1x8x256xf32>
    %141 = vector.shape_cast %140 : vector<1x8x256xf32> to vector<8x256xf32>
    %142 = vector.broadcast %77 : vector<8x1xf32> to vector<8x256xf32>
    %143 = arith.subf %141, %142 : vector<8x256xf32>
    %144 = vector.broadcast %115 : vector<8x1xf32> to vector<8x256xf32>
    %145 = arith.mulf %143, %144 : vector<8x256xf32>
    %cst_123 = arith.constant 0.000000e+00 : f32
    %146 = vector.broadcast %cst_123 : f32 to vector<8x256xf32>
    %147 = arith.maximumf %145, %146 : vector<8x256xf32>
    %148 = arith.truncf %147 : vector<8x256xf32> to vector<8x256xbf16>
    %c0_124 = arith.constant 0 : index
    %c2_125 = arith.constant 2 : index
    %c0_126 = arith.constant 0 : index
    %c0_127 = arith.constant 0 : index
    %149 = vector.load %arg5[%c0_124, %c2_125, %c0_126, %c0_127] : memref<1x4x8x256xbf16, #tpu.memory_space<vmem>>, vector<1x1x8x256xbf16>
    %150 = vector.shape_cast %149 : vector<1x1x8x256xbf16> to vector<8x256xbf16>
    %151 = vector.shape_cast %148 : vector<8x256xbf16> to vector<1x1x8x256xbf16>
    tpu.vector_store %arg5[%c0_124, %c2_125, %c0_126, %c0_127], %151 {strides = array<i32>} : memref<1x4x8x256xbf16, #tpu.memory_space<vmem>>, vector<1x1x8x256xbf16>,
    %c3_128 = arith.constant 3 : index
    %c0_129 = arith.constant 0 : index
    %c0_130 = arith.constant 0 : index
    %152 = vector.load %arg6[%c3_128, %c0_129, %c0_130] : memref<4x8x256xf32, #tpu.memory_space<vmem>>, vector<1x8x256xf32>
    %153 = vector.shape_cast %152 : vector<1x8x256xf32> to vector<8x256xf32>
    %154 = vector.broadcast %77 : vector<8x1xf32> to vector<8x256xf32>
    %155 = arith.subf %153, %154 : vector<8x256xf32>
    %156 = vector.broadcast %115 : vector<8x1xf32> to vector<8x256xf32>
    %157 = arith.mulf %155, %156 : vector<8x256xf32>
    %cst_131 = arith.constant 0.000000e+00 : f32
    %158 = vector.broadcast %cst_131 : f32 to vector<8x256xf32>
    %159 = arith.maximumf %157, %158 : vector<8x256xf32>
    %160 = arith.truncf %159 : vector<8x256xf32> to vector<8x256xbf16>
    %c0_132 = arith.constant 0 : index
    %c3_133 = arith.constant 3 : index
    %c0_134 = arith.constant 0 : index
    %c0_135 = arith.constant 0 : index
    %161 = vector.load %arg5[%c0_132, %c3_133, %c0_134, %c0_135] : memref<1x4x8x256xbf16, #tpu.memory_space<vmem>>, vector<1x1x8x256xbf16>
    %162 = vector.shape_cast %161 : vector<1x1x8x256xbf16> to vector<8x256xbf16>
    %163 = vector.shape_cast %160 : vector<8x256xbf16> to vector<1x1x8x256xbf16>
    tpu.vector_store %arg5[%c0_132, %c3_133, %c0_134, %c0_135], %163 {strides = array<i32>} : memref<1x4x8x256xbf16, #tpu.memory_space<vmem>>, vector<1x1x8x256xbf16>,
    return
  }
  func.func @transform_0(%arg0: i32, %arg1: i32) -> (i32, i32, i32, i32) {
    %c0_i32 = arith.constant 0 : i32
    %c0_i32_0 = arith.constant 0 : i32
    %c0_i32_1 = arith.constant 0 : i32
    %c0_i32_2 = arith.constant 0 : i32
    return %arg0, %c0_i32, %c0_i32_0, %c0_i32_1 : i32, i32, i32, i32
  }
  func.func @transform_1(%arg0: i32, %arg1: i32) -> (i32, i32, i32, i32) {
    %c0_i32 = arith.constant 0 : i32
    %c0_i32_0 = arith.constant 0 : i32
    %c0_i32_1 = arith.constant 0 : i32
    %c0_i32_2 = arith.constant 0 : i32
    return %c0_i32, %c0_i32_0, %arg1, %c0_i32_1 : i32, i32, i32, i32
  }
  func.func @transform_2(%arg0: i32, %arg1: i32) -> (i32, i32) {
    %c0_i32 = arith.constant 0 : i32
    %c0_i32_0 = arith.constant 0 : i32
    return %arg1, %c0_i32 : i32, i32
  }
  func.func @transform_3(%arg0: i32, %arg1: i32) -> (i32, i32, i32, i32) {
    %c0_i32 = arith.constant 0 : i32
    %c0_i32_0 = arith.constant 0 : i32
    %c0_i32_1 = arith.constant 0 : i32
    return %arg0, %c0_i32, %arg1, %c0_i32_0 : i32, i32, i32, i32
  }
}

</mosaic_0001>

<llo_original>
// kernel: deconv_block.1
$region0: #{deconv_block.1}
  #allocation0 [shape = 'u32[]', space=smem, size = 0x4, offset = 0x4, fixed_abs, tag = 'smem constant byte address 0x4 - core index']
  #allocation1 [shape = 'u32[144,128]{1,0:T(1,128)}', space=vmem, size = 0x12000, scoped, tag = 'internal scratch']
  #allocation2 [shape = 'f32[4,8,256]{2,1,0:T(8,128)}', space=vmem, size = 0x8000, scoped, tag = 'scratch operand']
  %s0 = inlined_call_operand.vmem [shape: bf16[2,2,8,288], index: 0, kind: input, shape index: {}]
  %s1 = inlined_call_operand.vmem [shape: bf16[4,2,8,8], index: 1, kind: input, shape index: {}]
  %s2 = inlined_call_operand.vmem [shape: f32[8,1], index: 2, kind: input, shape index: {}]
  %s3 = inlined_call_operand.vmem [shape: bf16[2,4,8,256], index: 3, kind: output, shape index: {}]
  %s4 = sld [smem:[#allocation0]]
  $region45: #{deconv_block.1} parent=0
    _
  %s6 = ssub.s32 1, %s4
  %s7 = scalar_select 0, %s6, %s4
  loop: start=0, step=1, limit=4
  $region2: #{deconv_block.1} parent=0 // loop_pre_header
    _
  $region3: #{deconv_block.1} parent=0 // loop_header
    %s9 = sphi 0, %s13
    %p10 = scmp.ge.s32.totalorder %s9, 4
    %s16 = sphi 0, %s28
    %s17 = sphi 0, %s24
    %s18 = sphi 0, %s16
    %s19 = sphi 0, %s17
    %s20 = sphi 0, %s18
    %s21 = sphi 0, %s19
    %s31 = sphi 0, %s33
    %s34 = sphi 0, %s31
    %s35 = sphi 0, %s34
    %s51 = sphi 0, %s35
    %s57 = sphi 0, %s59
    %s60 = sphi 0, %s57
    %s61 = sphi 0, %s60
    %s77 = sphi 0, %s61
    %s83 = sphi 0, %s85
    %s86 = sphi 0, %s83
    %s87 = sphi 0, %s86
    %s103 = sphi 0, %s87
    %s111 = sphi 0, %s113
    %s114 = sphi 0, %s111
    %s115 = sphi 0, %s114
    %s131 = sphi 0, %s115
  $region4: #{deconv_block.1} parent=0 // loop_header_branch
    %12 = sbr.rel (%p10) target = $region8
  $region5: #{deconv_block.1} parent=0 // loop_body
    %s14 = ssub.s32 %s9, 1
    %s15 = ssub.s32 %s9, 2
    %s22 = sadd.s32 1, %s17
    %p23 = scmp.ge.s32.totalorder %s22, 1
    %s24 = scalar_select %p23, 0, %s22
    %s25 = sadd.s32 1, %s16
    %s26 = scalar_select %p23, %s25, %s16
    %p27 = scmp.ge.s32.totalorder %s26, 2
    %s28 = scalar_select %p27, 0, %s26
    %s29 = ssub.s32 %s16, %s28
    %p30 = scmp.eq.s32.totalorder %s29, 0
    %s32 = sadd.s32 %s31, 1
    %s33 = scalar_select %p30, %s31, %s32
    %p36 = pneg %p30
    %p37 = scmp.eq.s32.totalorder %s9, 1
    %p38 = por %p36, %p37
    %p39 = scmp.ne.s32.totalorder %s31, %s34
    %p40 = scmp.eq.s32.totalorder %s9, 0
    %p41 = por %p39, %p40
    %p42 = scmp.ne.s32.totalorder %s31, %s34
    %p43 = scmp.eq.s32.totalorder %s14, 1
    %p44 = por %p42, %p43
    %p45 = scmp.ne.s32.totalorder %s34, %s35
    %p46 = scmp.eq.s32.totalorder %s14, 0
    %p47 = por %p45, %p46
    %p48 = scmp.ne.s32.totalorder %s34, %s35
    %p49 = scmp.eq.s32.totalorder %s15, 1
    %p50 = por %p48, %p49
    %p52 = scmp.ne.s32.totalorder %s35, %s51
    %p53 = scmp.eq.s32.totalorder %s15, 0
    %p54 = por %p52, %p53
    %s55 = ssub.s32 %s17, %s24
    %p56 = scmp.eq.s32.totalorder %s55, 0
    %s58 = sadd.s32 %s57, 1
    %s59 = scalar_select %p56, %s57, %s58
    %p62 = pneg %p56
    %p63 = scmp.eq.s32.totalorder %s9, 1
    %p64 = por %p62, %p63
    %p65 = scmp.ne.s32.totalorder %s57, %s60
    %p66 = scmp.eq.s32.totalorder %s9, 0
    %p67 = por %p65, %p66
    %p68 = scmp.ne.s32.totalorder %s57, %s60
    %p69 = scmp.eq.s32.totalorder %s14, 1
    %p70 = por %p68, %p69
    %p71 = scmp.ne.s32.totalorder %s60, %s61
    %p72 = scmp.eq.s32.totalorder %s14, 0
    %p73 = por %p71, %p72
    %p74 = scmp.ne.s32.totalorder %s60, %s61
    %p75 = scmp.eq.s32.totalorder %s15, 1
    %p76 = por %p74, %p75
    %p78 = scmp.ne.s32.totalorder %s61, %s77
    %p79 = scmp.eq.s32.totalorder %s15, 0
    %p80 = por %p78, %p79
    %s81 = ssub.s32 %s17, %s24
    %p82 = scmp.eq.s32.totalorder %s81, 0
    %s84 = sadd.s32 %s83, 1
    %s85 = scalar_select %p82, %s83, %s84
    %p88 = pneg %p82
    %p89 = scmp.eq.s32.totalorder %s9, 1
    %p90 = por %p88, %p89
    %p91 = scmp.ne.s32.totalorder %s83, %s86
    %p92 = scmp.eq.s32.totalorder %s9, 0
    %p93 = por %p91, %p92
    %p94 = scmp.ne.s32.totalorder %s83, %s86
    %p95 = scmp.eq.s32.totalorder %s14, 1
    %p96 = por %p94, %p95
    %p97 = scmp.ne.s32.totalorder %s86, %s87
    %p98 = scmp.eq.s32.totalorder %s14, 0
    %p99 = por %p97, %p98
    %p100 = scmp.ne.s32.totalorder %s86, %s87
    %p101 = scmp.eq.s32.totalorder %s15, 1
    %p102 = por %p100, %p101
    %p104 = scmp.ne.s32.totalorder %s87, %s103
    %p105 = scmp.eq.s32.totalorder %s15, 0
    %p106 = por %p104, %p105
    %s107 = ssub.s32 %s16, %s28
    %s108 = ssub.s32 %s17, %s24
    %s109 = sor.u32 %s107, %s108
    %p110 = scmp.eq.s32.totalorder %s109, 0
    %s112 = sadd.s32 %s111, 1
    %s113 = scalar_select %p110, %s111, %s112
    %p116 = pneg %p110
    %p117 = scmp.eq.s32.totalorder %s9, 1
    %p118 = por %p116, %p117
    %p119 = scmp.ne.s32.totalorder %s111, %s114
    %p120 = scmp.eq.s32.totalorder %s9, 0
    %p121 = por %p119, %p120
    %p122 = scmp.ne.s32.totalorder %s111, %s114
    %p123 = scmp.eq.s32.totalorder %s14, 1
    %p124 = por %p122, %p123
    %p125 = scmp.ne.s32.totalorder %s114, %s115
    %p126 = scmp.eq.s32.totalorder %s14, 0
    %p127 = por %p125, %p126
    %p128 = scmp.ne.s32.totalorder %s114, %s115
    %p129 = scmp.eq.s32.totalorder %s15, 1
    %p130 = por %p128, %p129
    %p132 = scmp.ne.s32.totalorder %s115, %s131
    %p133 = scmp.eq.s32.totalorder %s15, 0
    %p134 = por %p132, %p133
    %p135 = scmp.le.s32.totalorder 1, %s9
    %p136 = scmp.lt.s32.totalorder %s9, 3
    %p137 = pnand %p135, %p136
    %p138 = pneg %p137
    // Predicated region
    $region9: #{deconv_block.1} parent=5 // pred_check
      _
    $region10: #{deconv_block.1} parent=5 // pred_check_branch
      %140 = sbr.rel (%p137) target = $region12
    $region11: #{deconv_block.1} parent=5 // pred_region
      %s141 = ssub.s32 %s9, 1
      // Predicated region
      $region13: #{deconv_block.1} parent=11 // pred_check
        %p142 = pneg %p73
      $region14: #{deconv_block.1} parent=11 // pred_check_branch
        %144 = sbr.rel (%p142) target = $region16
      $region15: #{deconv_block.1} parent=11 // pred_region
        %p145 = scmp.lt.s32.totalorder %s19, 0
        %s146 = scalar_select %p145, %s19, 0
        %s147 = smul.addr %s146, 4
        %s148 = scalar_lea.vmem %s1, %s147
      $region16: #{deconv_block.1} parent=11 // pred_fallthru
        _
      // Predicated region
      $region17: #{deconv_block.1} parent=11 // pred_check
        %p149 = pneg %p99
      $region18: #{deconv_block.1} parent=11 // pred_check_branch
        %151 = sbr.rel (%p149) target = $region20
      $region19: #{deconv_block.1} parent=11 // pred_region
        %p152 = scmp.lt.s32.totalorder %s19, 0
        %s153 = scalar_select %p152, %s19, 0
        %s154 = smul.addr %s153, 8
        %s155 = scalar_lea.vmem %s2, %s154
      $region20: #{deconv_block.1} parent=11 // pred_fallthru
        _
    $region12: #{deconv_block.1} parent=5 // pred_fallthru
      _
    %p156 = scmp.lt.s32.totalorder %s9, 2
    // Predicated region
    $region21: #{deconv_block.1} parent=5 // pred_check
      %p157 = pneg %p156
    $region22: #{deconv_block.1} parent=5 // pred_check_branch
      %159 = sbr.rel (%p157) target = $region24
    $region23: #{deconv_block.1} parent=5 // pred_region
      // Predicated region
      $region25: #{deconv_block.1} parent=23 // pred_check
        %p160 = pneg %p41
      $region26: #{deconv_block.1} parent=23 // pred_check_branch
        %162 = sbr.rel (%p160) target = $region28
      $region27: #{deconv_block.1} parent=23 // pred_region
        %p163 = scmp.lt.s32.totalorder %s16, 1
        %s164 = scalar_select %p163, %s16, 1
        %s165 = smul.addr %s164, 6
        %s166 = smul.addr %s165, 4
        %s167 = scalar_lea.vmem %s0, %s166
      $region28: #{deconv_block.1} parent=23 // pred_fallthru
        _
    $region24: #{deconv_block.1} parent=5 // pred_fallthru
      _
    %p168 = scmp.le.s32.totalorder 1, %s9
    %p169 = scmp.lt.s32.totalorder %s9, 3
    %p170 = pnand %p168, %p169
    %p171 = pneg %p170
    // Predicated region
    $region29: #{deconv_block.1} parent=5 // pred_check
      _
    $region30: #{deconv_block.1} parent=5 // pred_check_branch
      %173 = sbr.rel (%p170) target = $region32
    $region31: #{deconv_block.1} parent=5 // pred_region
      %s174 = ssub.s32 %s9, 1
      %p175 = scmp.lt.s32.totalorder %s18, 1
      %s176 = scalar_select %p175, %s18, 1
      %s177 = smul.addr %s176, 6
      %s178 = smul.addr %s177, 4
      %s179 = scalar_lea.vmem %s0, %s178
      %p180 = pneg %p47
      %p181 = pneg %p44
      %p182 = scmp.lt.s32.totalorder %s19, 0
      %s183 = scalar_select %p182, %s19, 0
      %s184 = smul.addr %s183, 4
      %s185 = scalar_lea.vmem %s1, %s184
      %p186 = pneg %p73
      %p187 = pneg %p70
      %p188 = scmp.lt.s32.totalorder %s19, 0
      %s189 = scalar_select %p188, %s19, 0
      %s190 = smul.addr %s189, 8
      %s191 = scalar_lea.vmem %s2, %s190
      %p192 = pneg %p99
      %p193 = pneg %p96
      %p194 = pneg %p127
      %p195 = pneg %p124
      %p196 = scmp.lt.s32.totalorder %s18, 1
      %s197 = scalar_select %p196, %s18, 1
      %p198 = scmp.lt.s32.totalorder %s19, 0
      %s199 = scalar_select %p198, %s19, 0
      %s200 = smul.addr %s199, 2
      %s201 = smul.addr %s197, 8
      %s202 = sadd.s32 %s200, %s201
      %s203 = smul.addr %s202, 4
      %s204 = scalar_lea.vmem %s3, %s203
      %p205 = scmp.lt.s32.totalorder %s18, 1
      %s206 = scalar_select %p205, %s18, 1
      %s207 = smul.addr %s206, 6
      %s208 = smul.addr %s207, 4
      %s209 = scalar_lea.vmem %s0, %s208
      %p210 = scmp.lt.s32.totalorder %s19, 0
      %s211 = scalar_select %p210, %s19, 0
      %s212 = smul.addr %s211, 4
      %s213 = scalar_lea.vmem %s1, %s212
      %p214 = scmp.lt.s32.totalorder %s19, 0
      %s215 = scalar_select %p214, %s19, 0
      %s216 = smul.addr %s215, 8
      %s217 = scalar_lea.vmem %s2, %s216
      %p218 = scmp.lt.s32.totalorder %s18, 1
      %s219 = scalar_select %p218, %s18, 1
      %p220 = scmp.lt.s32.totalorder %s19, 0
      %s221 = scalar_select %p220, %s19, 0
      %s222 = smul.addr %s221, 2
      %s223 = smul.addr %s219, 8
      %s224 = sadd.s32 %s222, %s223
      %s225 = smul.addr %s224, 4
      %s226 = scalar_lea.vmem %s3, %s225
      %v228 = vld [vmem:[%s217] sm:$0xff]
      %230 = vset.pattern.permute.xlu0 0
      %231 = vperm.xlu0 %230, %v228
      %v232 = vpop.permute.xlu0 %231
      %v234 = vld [vmem:[%s209] sm:$0xff]
      %v235 = vld [vmem:[%s213] sm:$0xf]
      %v237 = vunpack.c.l.b16 %v234
      %v238 = vunpack.c.h.b16 %v234
      %v239 = vpack.c.b16 %v237, %v237
      %v240 = vpack.c.b16 %v238, %v238
      %vm241 = vcmask 64512
      %v243 = vsel %vm241, %v235, 0
      %vm245 = vcmask 1043456
      %v247 = vsel %vm245, %v239, 0
      %v250 = vsel %vm245, %v240, 0
      %252 = vmatprep.subr.bf16.mxu0 %v250
      %253 = vmatpush1.bf16.msra.mxu0 %v247
      %254 = vmatprep.subr.bf16.mxu0 0
      %255 = vmatpush1.bf16.msra.mxu0 0
      %256 = vmatprep.subr.bf16.mxu0 0
      %257 = vmatpush1.bf16.msra.mxu0 0
      %258 = vmatprep.subr.bf16.mxu0 0
      %259 = vmatpush1.bf16.msra.mxu0 0
      %260 = vmatprep.subr.bf16.mxu0 0
      %261 = vmatpush1.bf16.msra.mxu0 0
      %262 = vmatprep.subr.bf16.mxu0 0
      %263 = vmatpush1.bf16.msra.mxu0 0
      %264 = vmatprep.subr.bf16.mxu0 0
      %265 = vmatpush1.bf16.msra.mxu0 0
      %266 = vmatprep.subr.bf16.mxu0 0
      %267 = vmatpush1.bf16.msra.mxu0 0
      %268 = vmatprep.subr.bf16.mxu0 0
      %269 = vmatpush1.bf16.msra.mxu0 0
      %270 = vmatprep.subr.bf16.mxu0 0
      %271 = vmatpush1.bf16.msra.mxu0 0
      %272 = vmatprep.subr.bf16.mxu0 0
      %273 = vmatpush1.bf16.msra.mxu0 0
      %274 = vmatprep.subr.bf16.mxu0 0
      %275 = vmatpush1.bf16.msra.mxu0 0
      %276 = vmatprep.subr.bf16.mxu0 0
      %277 = vmatpush1.bf16.msra.mxu0 0
      %278 = vmatprep.subr.bf16.mxu0 0
      %279 = vmatpush1.bf16.msra.mxu0 0
      %280 = vmatprep.subr.bf16.mxu0 0
      %281 = vmatpush1.bf16.msra.mxu0 0
      %282 = vmatprep.subr.bf16.mxu0 0
      %283 = vmatpush1.bf16.msra.mxu0 0
      %284 = vmatprep.mubr.bf16.mxu0 0
      %285 = vmatmul.mubr.bf16.gmra.mrb[0].mxu0 %v243
      %v286 = vpop.f32.mrb[0].mxu0
      %v287 = vadd.f32 0.0, %v286
      %v288 = vpop.f32.mrb[0].mxu0
      %v289 = vadd.f32 0.0, %v288
      %v290 = vpop.f32.mrb[0].mxu0
      %v291 = vpop.f32.mrb[0].mxu0
      %292 = vdwg.mxu0
      %v293 = vadd.f32 %v232, %v287
      %v294 = vadd.f32 %v232, %v289
      %v295 = vld [vmem:[%s209] sm:$0xff]
      %v296 = vld [vmem:[%s209 + $0x8] sm:$0xf]
      %s297 = scalar_lea.vmem %s213, 4
      %v298 = vld [vmem:[%s297] sm:$0xf]
      %v301 = vunpack.c.l.b16 %v295
      %v302 = vunpack.c.h.b16 %v295
      %v303 = vunpack.c.l.b16 %v296
      %v304 = vpack.c.b16 %v301, %v301
      %v305 = vpack.c.b16 %v302, %v302
      %v306 = vpack.c.b16 %v303, %v303
      %307 = vrot.lane.b32.xlu0 %v304, 112
      %v308 = vpop.permute.xlu0 %307
      %309 = vrot.lane.b32.xlu0 %v305, 112
      %v310 = vpop.permute.xlu0 %309
      %311 = vrot.lane.b32.xlu0 %v306, 112
      %v312 = vpop.permute.xlu0 %311
      %vm313 = vcmask 916480
      %v314 = vsel %vm313, %v308, %v310
      %v315 = vsel %vm313, %v310, %v312
      %v317 = vsel %vm241, %v298, 0
      %v320 = vsel %vm245, %v314, 0
      %v323 = vsel %vm245, %v315, 0
      %325 = vmatprep.subr.bf16.mxu0 %v323
      %326 = vmatpush1.bf16.msra.mxu0 %v320
      %327 = vmatprep.subr.bf16.mxu0 0
      %328 = vmatpush1.bf16.msra.mxu0 0
      %329 = vmatprep.subr.bf16.mxu0 0
      %330 = vmatpush1.bf16.msra.mxu0 0
      %331 = vmatprep.subr.bf16.mxu0 0
      %332 = vmatpush1.bf16.msra.mxu0 0
      %333 = vmatprep.subr.bf16.mxu0 0
      %334 = vmatpush1.bf16.msra.mxu0 0
      %335 = vmatprep.subr.bf16.mxu0 0
      %336 = vmatpush1.bf16.msra.mxu0 0
      %337 = vmatprep.subr.bf16.mxu0 0
      %338 = vmatpush1.bf16.msra.mxu0 0
      %339 = vmatprep.subr.bf16.mxu0 0
      %340 = vmatpush1.bf16.msra.mxu0 0
      %341 = vmatprep.subr.bf16.mxu0 0
      %342 = vmatpush1.bf16.msra.mxu0 0
      %343 = vmatprep.subr.bf16.mxu0 0
      %344 = vmatpush1.bf16.msra.mxu0 0
      %345 = vmatprep.subr.bf16.mxu0 0
      %346 = vmatpush1.bf16.msra.mxu0 0
      %347 = vmatprep.subr.bf16.mxu0 0
      %348 = vmatpush1.bf16.msra.mxu0 0
      %349 = vmatprep.subr.bf16.mxu0 0
      %350 = vmatpush1.bf16.msra.mxu0 0
      %351 = vmatprep.subr.bf16.mxu0 0
      %352 = vmatpush1.bf16.msra.mxu0 0
      %353 = vmatprep.subr.bf16.mxu0 0
      %354 = vmatpush1.bf16.msra.mxu0 0
      %355 = vmatprep.subr.bf16.mxu0 0
      %356 = vmatpush1.bf16.msra.mxu0 0
      %357 = vmatprep.mubr.bf16.mxu0 0
      %358 = vmatmul.mubr.bf16.gmra.mrb[0].mxu0 %v317
      %v359 = vpop.f32.mrb[0].mxu0
      %v360 = vadd.f32 0.0, %v359
      %v361 = vpop.f32.mrb[0].mxu0
      %v362 = vadd.f32 0.0, %v361
      %v363 = vpop.f32.mrb[0].mxu0
      %v364 = vpop.f32.mrb[0].mxu0
      %365 = vdwg.mxu0
      %v366 = vadd.f32 %v293, %v360
      %v367 = vadd.f32 %v294, %v362
      %368 = vst [vmem:[#allocation2] sm:$0xff] %v366
      %369 = vst [vmem:[#allocation2 + $0x8] sm:$0xff] %v367
      %v370 = vadd.f32 %v366, %v367
      %371 = vadd.xlane.f32.xlu0 %v370
      %v372 = vpop.xlane.xlu0 %371
      %v373 = vadd.f32 %v372, 0.0
      %s374 = scalar_lea.vmem %s209, 12
      %v375 = vld [vmem:[%s374] sm:$0xff]
      %s376 = scalar_lea.vmem %s213, 8
      %v377 = vld [vmem:[%s376] sm:$0xf]
      %v379 = vunpack.c.l.b16 %v375
      %v380 = vunpack.c.h.b16 %v375
      %v381 = vpack.c.b16 %v379, %v379
      %v382 = vpack.c.b16 %v380, %v380
      %v384 = vsel %vm241, %v377, 0
      %v387 = vsel %vm245, %v381, 0
      %v390 = vsel %vm245, %v382, 0
      %392 = vmatprep.subr.bf16.mxu0 %v390
      %393 = vmatpush1.bf16.msra.mxu0 %v387
      %394 = vmatprep.subr.bf16.mxu0 0
      %395 = vmatpush1.bf16.msra.mxu0 0
      %396 = vmatprep.subr.bf16.mxu0 0
      %397 = vmatpush1.bf16.msra.mxu0 0
      %398 = vmatprep.subr.bf16.mxu0 0
      %399 = vmatpush1.bf16.msra.mxu0 0
      %400 = vmatprep.subr.bf16.mxu0 0
      %401 = vmatpush1.bf16.msra.mxu0 0
      %402 = vmatprep.subr.bf16.mxu0 0
      %403 = vmatpush1.bf16.msra.mxu0 0
      %404 = vmatprep.subr.bf16.mxu0 0
      %405 = vmatpush1.bf16.msra.mxu0 0
      %406 = vmatprep.subr.bf16.mxu0 0
      %407 = vmatpush1.bf16.msra.mxu0 0
      %408 = vmatprep.subr.bf16.mxu0 0
      %409 = vmatpush1.bf16.msra.mxu0 0
      %410 = vmatprep.subr.bf16.mxu0 0
      %411 = vmatpush1.bf16.msra.mxu0 0
      %412 = vmatprep.subr.bf16.mxu0 0
      %413 = vmatpush1.bf16.msra.mxu0 0
      %414 = vmatprep.subr.bf16.mxu0 0
      %415 = vmatpush1.bf16.msra.mxu0 0
      %416 = vmatprep.subr.bf16.mxu0 0
      %417 = vmatpush1.bf16.msra.mxu0 0
      %418 = vmatprep.subr.bf16.mxu0 0
      %419 = vmatpush1.bf16.msra.mxu0 0
      %420 = vmatprep.subr.bf16.mxu0 0
      %421 = vmatpush1.bf16.msra.mxu0 0
      %422 = vmatprep.subr.bf16.mxu0 0
      %423 = vmatpush1.bf16.msra.mxu0 0
      %424 = vmatprep.mubr.bf16.mxu0 0
      %425 = vmatmul.mubr.bf16.gmra.mrb[0].mxu0 %v384
      %v426 = vpop.f32.mrb[0].mxu0
      %v427 = vadd.f32 0.0, %v426
      %v428 = vpop.f32.mrb[0].mxu0
      %v429 = vadd.f32 0.0, %v428
      %v430 = vpop.f32.mrb[0].mxu0
      %v431 = vpop.f32.mrb[0].mxu0
      %432 = vdwg.mxu0
      %v433 = vadd.f32 %v232, %v427
      %v434 = vadd.f32 %v232, %v429
      %v435 = vld [vmem:[%s374] sm:$0xff]
      %v436 = vld [vmem:[%s374 + $0x8] sm:$0xf]
      %s437 = scalar_lea.vmem %s213, 12
      %v438 = vld [vmem:[%s437] sm:$0xf]
      %v441 = vunpack.c.l.b16 %v435
      %v442 = vunpack.c.h.b16 %v435
      %v443 = vunpack.c.l.b16 %v436
      %v444 = vpack.c.b16 %v441, %v441
      %v445 = vpack.c.b16 %v442, %v442
      %v446 = vpack.c.b16 %v443, %v443
      %447 = vrot.lane.b32.xlu0 %v444, 112
      %v448 = vpop.permute.xlu0 %447
      %449 = vrot.lane.b32.xlu0 %v445, 112
      %v450 = vpop.permute.xlu0 %449
      %451 = vrot.lane.b32.xlu0 %v446, 112
      %v452 = vpop.permute.xlu0 %451
      %v453 = vsel %vm313, %v448, %v450
      %v454 = vsel %vm313, %v450, %v452
      %v456 = vsel %vm241, %v438, 0
      %v459 = vsel %vm245, %v453, 0
      %v462 = vsel %vm245, %v454, 0
      %464 = vmatprep.subr.bf16.mxu0 %v462
      %465 = vmatpush1.bf16.msra.mxu0 %v459
      %466 = vmatprep.subr.bf16.mxu0 0
      %467 = vmatpush1.bf16.msra.mxu0 0
      %468 = vmatprep.subr.bf16.mxu0 0
      %469 = vmatpush1.bf16.msra.mxu0 0
      %470 = vmatprep.subr.bf16.mxu0 0
      %471 = vmatpush1.bf16.msra.mxu0 0
      %472 = vmatprep.subr.bf16.mxu0 0
      %473 = vmatpush1.bf16.msra.mxu0 0
      %474 = vmatprep.subr.bf16.mxu0 0
      %475 = vmatpush1.bf16.msra.mxu0 0
      %476 = vmatprep.subr.bf16.mxu0 0
      %477 = vmatpush1.bf16.msra.mxu0 0
      %478 = vmatprep.subr.bf16.mxu0 0
      %479 = vmatpush1.bf16.msra.mxu0 0
      %480 = vmatprep.subr.bf16.mxu0 0
      %481 = vmatpush1.bf16.msra.mxu0 0
      %482 = vmatprep.subr.bf16.mxu0 0
      %483 = vmatpush1.bf16.msra.mxu0 0
      %484 = vmatprep.subr.bf16.mxu0 0
      %485 = vmatpush1.bf16.msra.mxu0 0
      %486 = vmatprep.subr.bf16.mxu0 0
      %487 = vmatpush1.bf16.msra.mxu0 0
      %488 = vmatprep.subr.bf16.mxu0 0
      %489 = vmatpush1.bf16.msra.mxu0 0
      %490 = vmatprep.subr.bf16.mxu0 0
      %491 = vmatpush1.bf16.msra.mxu0 0
      %492 = vmatprep.subr.bf16.mxu0 0
      %493 = vmatpush1.bf16.msra.mxu0 0
      %494 = vmatprep.subr.bf16.mxu0 0
      %495 = vmatpush1.bf16.msra.mxu0 0
      %496 = vmatprep.mubr.bf16.mxu0 0
      %497 = vmatmul.mubr.bf16.gmra.mrb[0].mxu0 %v456
      %v498 = vpop.f32.mrb[0].mxu0
      %v499 = vadd.f32 0.0, %v498
      %v500 = vpop.f32.mrb[0].mxu0
      %v501 = vadd.f32 0.0, %v500
      %v502 = vpop.f32.mrb[0].mxu0
      %v503 = vpop.f32.mrb[0].mxu0
      %504 = vdwg.mxu0
      %v505 = vadd.f32 %v433, %v499
      %v506 = vadd.f32 %v434, %v501
      %s507 = scalar_lea.vmem [#allocation2], 16
      %508 = vst [vmem:[%s507] sm:$0xff] %v505
      %509 = vst [vmem:[%s507 + $0x8] sm:$0xff] %v506
      %v510 = vadd.f32 %v505, %v506
      %511 = vadd.xlane.f32.xlu0 %v510
      %v512 = vpop.xlane.xlu0 %511
      %v513 = vadd.f32 %v373, %v512
      %v514 = vld [vmem:[%s209] sm:$0xff]
      %v515 = vld [vmem:[%s209 + $0x8] sm:$0xf]
      %s516 = scalar_lea.vmem %s213, 16
      %v517 = vld [vmem:[%s516] sm:$0xf]
      %v520 = vunpack.c.l.b16 %v514
      %v521 = vunpack.c.h.b16 %v514
      %v522 = vunpack.c.l.b16 %v515
      %v523 = vpack.c.b16 %v520, %v520
      %v524 = vpack.c.b16 %v521, %v521
      %v525 = vpack.c.b16 %v522, %v522
      %526 = vrot.lane.b32.xlu0 %v523, 112
      %v527 = vpop.permute.xlu0 %526
      %528 = vrot.lane.b32.xlu0 %v524, 112
      %v529 = vpop.permute.xlu0 %528
      %530 = vrot.lane.b32.xlu0 %v525, 112
      %v531 = vpop.permute.xlu0 %530
      %v532 = vsel %vm313, %v527, %v529
      %v533 = vsel %vm313, %v529, %v531
      %v535 = vsel %vm241, %v517, 0
      %v538 = vsel %vm245, %v532, 0
      %v541 = vsel %vm245, %v533, 0
      %543 = vmatprep.subr.bf16.mxu0 %v541
      %544 = vmatpush1.bf16.msra.mxu0 %v538
      %545 = vmatprep.subr.bf16.mxu0 0
      %546 = vmatpush1.bf16.msra.mxu0 0
      %547 = vmatprep.subr.bf16.mxu0 0
      %548 = vmatpush1.bf16.msra.mxu0 0
      %549 = vmatprep.subr.bf16.mxu0 0
      %550 = vmatpush1.bf16.msra.mxu0 0
      %551 = vmatprep.subr.bf16.mxu0 0
      %552 = vmatpush1.bf16.msra.mxu0 0
      %553 = vmatprep.subr.bf16.mxu0 0
      %554 = vmatpush1.bf16.msra.mxu0 0
      %555 = vmatprep.subr.bf16.mxu0 0
      %556 = vmatpush1.bf16.msra.mxu0 0
      %557 = vmatprep.subr.bf16.mxu0 0
      %558 = vmatpush1.bf16.msra.mxu0 0
      %559 = vmatprep.subr.bf16.mxu0 0
      %560 = vmatpush1.bf16.msra.mxu0 0
      %561 = vmatprep.subr.bf16.mxu0 0
      %562 = vmatpush1.bf16.msra.mxu0 0
      %563 = vmatprep.subr.bf16.mxu0 0
      %564 = vmatpush1.bf16.msra.mxu0 0
      %565 = vmatprep.subr.bf16.mxu0 0
      %566 = vmatpush1.bf16.msra.mxu0 0
      %567 = vmatprep.subr.bf16.mxu0 0
      %568 = vmatpush1.bf16.msra.mxu0 0
      %569 = vmatprep.subr.bf16.mxu0 0
      %570 = vmatpush1.bf16.msra.mxu0 0
      %571 = vmatprep.subr.bf16.mxu0 0
      %572 = vmatpush1.bf16.msra.mxu0 0
      %573 = vmatprep.subr.bf16.mxu0 0
      %574 = vmatpush1.bf16.msra.mxu0 0
      %575 = vmatprep.mubr.bf16.mxu0 0
      %576 = vmatmul.mubr.bf16.gmra.mrb[0].mxu0 %v535
      %v577 = vpop.f32.mrb[0].mxu0
      %v578 = vadd.f32 0.0, %v577
      %v579 = vpop.f32.mrb[0].mxu0
      %v580 = vadd.f32 0.0, %v579
      %v581 = vpop.f32.mrb[0].mxu0
      %v582 = vpop.f32.mrb[0].mxu0
      %583 = vdwg.mxu0
      %v584 = vadd.f32 %v232, %v578
      %v585 = vadd.f32 %v232, %v580
      %s586 = scalar_lea.vmem %s213, 20
      %v587 = vld [vmem:[%s586] sm:$0xf]
      %588 = vrot.lane.b32.xlu0 %v523, 96
      %v589 = vpop.permute.xlu0 %588
      %590 = vrot.lane.b32.xlu0 %v524, 96
      %v591 = vpop.permute.xlu0 %590
      %592 = vrot.lane.b32.xlu0 %v525, 96
      %v593 = vpop.permute.xlu0 %592
      %vm594 = vcmask 785408
      %v595 = vsel %vm594, %v589, %v591
      %v596 = vsel %vm594, %v591, %v593
      %v598 = vsel %vm241, %v587, 0
      %v601 = vsel %vm245, %v595, 0
      %v604 = vsel %vm245, %v596, 0
      %606 = vmatprep.subr.bf16.mxu0 %v604
      %607 = vmatpush1.bf16.msra.mxu0 %v601
      %608 = vmatprep.subr.bf16.mxu0 0
      %609 = vmatpush1.bf16.msra.mxu0 0
      %610 = vmatprep.subr.bf16.mxu0 0
      %611 = vmatpush1.bf16.msra.mxu0 0
      %612 = vmatprep.subr.bf16.mxu0 0
      %613 = vmatpush1.bf16.msra.mxu0 0
      %614 = vmatprep.subr.bf16.mxu0 0
      %615 = vmatpush1.bf16.msra.mxu0 0
      %616 = vmatprep.subr.bf16.mxu0 0
      %617 = vmatpush1.bf16.msra.mxu0 0
      %618 = vmatprep.subr.bf16.mxu0 0
      %619 = vmatpush1.bf16.msra.mxu0 0
      %620 = vmatprep.subr.bf16.mxu0 0
      %621 = vmatpush1.bf16.msra.mxu0 0
      %622 = vmatprep.subr.bf16.mxu0 0
      %623 = vmatpush1.bf16.msra.mxu0 0
      %624 = vmatprep.subr.bf16.mxu0 0
      %625 = vmatpush1.bf16.msra.mxu0 0
      %626 = vmatprep.subr.bf16.mxu0 0
      %627 = vmatpush1.bf16.msra.mxu0 0
      %628 = vmatprep.subr.bf16.mxu0 0
      %629 = vmatpush1.bf16.msra.mxu0 0
      %630 = vmatprep.subr.bf16.mxu0 0
      %631 = vmatpush1.bf16.msra.mxu0 0
      %632 = vmatprep.subr.bf16.mxu0 0
      %633 = vmatpush1.bf16.msra.mxu0 0
      %634 = vmatprep.subr.bf16.mxu0 0
      %635 = vmatpush1.bf16.msra.mxu0 0
      %636 = vmatprep.subr.bf16.mxu0 0
      %637 = vmatpush1.bf16.msra.mxu0 0
      %638 = vmatprep.mubr.bf16.mxu0 0
      %639 = vmatmul.mubr.bf16.gmra.mrb[0].mxu0 %v598
      %v640 = vpop.f32.mrb[0].mxu0
      %v641 = vadd.f32 0.0, %v640
      %v642 = vpop.f32.mrb[0].mxu0
      %v643 = vadd.f32 0.0, %v642
      %v644 = vpop.f32.mrb[0].mxu0
      %v645 = vpop.f32.mrb[0].mxu0
      %646 = vdwg.mxu0
      %v647 = vadd.f32 %v584, %v641
      %v648 = vadd.f32 %v585, %v643
      %s649 = scalar_lea.vmem [#allocation2], 32
      %650 = vst [vmem:[%s649] sm:$0xff] %v647
      %651 = vst [vmem:[%s649 + $0x8] sm:$0xff] %v648
      %v652 = vadd.f32 %v647, %v648
      %653 = vadd.xlane.f32.xlu0 %v652
      %v654 = vpop.xlane.xlu0 %653
      %v655 = vadd.f32 %v513, %v654
      %v656 = vld [vmem:[%s374] sm:$0xff]
      %v657 = vld [vmem:[%s374 + $0x8] sm:$0xf]
      %s658 = scalar_lea.vmem %s213, 24
      %v659 = vld [vmem:[%s658] sm:$0xf]
      %v662 = vunpack.c.l.b16 %v656
      %v663 = vunpack.c.h.b16 %v656
      %v664 = vunpack.c.l.b16 %v657
      %v665 = vpack.c.b16 %v662, %v662
      %v666 = vpack.c.b16 %v663, %v663
      %v667 = vpack.c.b16 %v664, %v664
      %668 = vrot.lane.b32.xlu0 %v665, 112
      %v669 = vpop.permute.xlu0 %668
      %670 = vrot.lane.b32.xlu0 %v666, 112
      %v671 = vpop.permute.xlu0 %670
      %672 = vrot.lane.b32.xlu0 %v667, 112
      %v673 = vpop.permute.xlu0 %672
      %v674 = vsel %vm313, %v669, %v671
      %v675 = vsel %vm313, %v671, %v673
      %v677 = vsel %vm241, %v659, 0
      %v680 = vsel %vm245, %v674, 0
      %v683 = vsel %vm245, %v675, 0
      %685 = vmatprep.subr.bf16.mxu0 %v683
      %686 = vmatpush1.bf16.msra.mxu0 %v680
      %687 = vmatprep.subr.bf16.mxu0 0
      %688 = vmatpush1.bf16.msra.mxu0 0
      %689 = vmatprep.subr.bf16.mxu0 0
      %690 = vmatpush1.bf16.msra.mxu0 0
      %691 = vmatprep.subr.bf16.mxu0 0
      %692 = vmatpush1.bf16.msra.mxu0 0
      %693 = vmatprep.subr.bf16.mxu0 0
      %694 = vmatpush1.bf16.msra.mxu0 0
      %695 = vmatprep.subr.bf16.mxu0 0
      %696 = vmatpush1.bf16.msra.mxu0 0
      %697 = vmatprep.subr.bf16.mxu0 0
      %698 = vmatpush1.bf16.msra.mxu0 0
      %699 = vmatprep.subr.bf16.mxu0 0
      %700 = vmatpush1.bf16.msra.mxu0 0
      %701 = vmatprep.subr.bf16.mxu0 0
      %702 = vmatpush1.bf16.msra.mxu0 0
      %703 = vmatprep.subr.bf16.mxu0 0
      %704 = vmatpush1.bf16.msra.mxu0 0
      %705 = vmatprep.subr.bf16.mxu0 0
      %706 = vmatpush1.bf16.msra.mxu0 0
      %707 = vmatprep.subr.bf16.mxu0 0
      %708 = vmatpush1.bf16.msra.mxu0 0
      %709 = vmatprep.subr.bf16.mxu0 0
      %710 = vmatpush1.bf16.msra.mxu0 0
      %711 = vmatprep.subr.bf16.mxu0 0
      %712 = vmatpush1.bf16.msra.mxu0 0
      %713 = vmatprep.subr.bf16.mxu0 0
      %714 = vmatpush1.bf16.msra.mxu0 0
      %715 = vmatprep.subr.bf16.mxu0 0
      %716 = vmatpush1.bf16.msra.mxu0 0
      %717 = vmatprep.mubr.bf16.mxu0 0
      %718 = vmatmul.mubr.bf16.gmra.mrb[0].mxu0 %v677
      %v719 = vpop.f32.mrb[0].mxu0
      %v720 = vadd.f32 0.0, %v719
      %v721 = vpop.f32.mrb[0].mxu0
      %v722 = vadd.f32 0.0, %v721
      %v723 = vpop.f32.mrb[0].mxu0
      %v724 = vpop.f32.mrb[0].mxu0
      %725 = vdwg.mxu0
      %v726 = vadd.f32 %v232, %v720
      %v727 = vadd.f32 %v232, %v722
      %s728 = scalar_lea.vmem %s213, 28
      %v729 = vld [vmem:[%s728] sm:$0xf]
      %730 = vrot.lane.b32.xlu0 %v665, 96
      %v731 = vpop.permute.xlu0 %730
      %732 = vrot.lane.b32.xlu0 %v666, 96
      %v733 = vpop.permute.xlu0 %732
      %734 = vrot.lane.b32.xlu0 %v667, 96
      %v735 = vpop.permute.xlu0 %734
      %v736 = vsel %vm594, %v731, %v733
      %v737 = vsel %vm594, %v733, %v735
      %v739 = vsel %vm241, %v729, 0
      %v742 = vsel %vm245, %v736, 0
      %v745 = vsel %vm245, %v737, 0
      %747 = vmatprep.subr.bf16.mxu0 %v745
      %748 = vmatpush1.bf16.msra.mxu0 %v742
      %749 = vmatprep.subr.bf16.mxu0 0
      %750 = vmatpush1.bf16.msra.mxu0 0
      %751 = vmatprep.subr.bf16.mxu0 0
      %752 = vmatpush1.bf16.msra.mxu0 0
      %753 = vmatprep.subr.bf16.mxu0 0
      %754 = vmatpush1.bf16.msra.mxu0 0
      %755 = vmatprep.subr.bf16.mxu0 0
      %756 = vmatpush1.bf16.msra.mxu0 0
      %757 = vmatprep.subr.bf16.mxu0 0
      %758 = vmatpush1.bf16.msra.mxu0 0
      %759 = vmatprep.subr.bf16.mxu0 0
      %760 = vmatpush1.bf16.msra.mxu0 0
      %761 = vmatprep.subr.bf16.mxu0 0
      %762 = vmatpush1.bf16.msra.mxu0 0
      %763 = vmatprep.subr.bf16.mxu0 0
      %764 = vmatpush1.bf16.msra.mxu0 0
      %765 = vmatprep.subr.bf16.mxu0 0
      %766 = vmatpush1.bf16.msra.mxu0 0
      %767 = vmatprep.subr.bf16.mxu0 0
      %768 = vmatpush1.bf16.msra.mxu0 0
      %769 = vmatprep.subr.bf16.mxu0 0
      %770 = vmatpush1.bf16.msra.mxu0 0
      %771 = vmatprep.subr.bf16.mxu0 0
      %772 = vmatpush1.bf16.msra.mxu0 0
      %773 = vmatprep.subr.bf16.mxu0 0
      %774 = vmatpush1.bf16.msra.mxu0 0
      %775 = vmatprep.subr.bf16.mxu0 0
      %776 = vmatpush1.bf16.msra.mxu0 0
      %777 = vmatprep.subr.bf16.mxu0 0
      %778 = vmatpush1.bf16.msra.mxu0 0
      %779 = vmatprep.mubr.bf16.mxu0 0
      %780 = vmatmul.mubr.bf16.gmra.mrb[0].mxu0 %v739
      %v781 = vpop.f32.mrb[0].mxu0
      %v782 = vadd.f32 0.0, %v781
      %v783 = vpop.f32.mrb[0].mxu0
      %v784 = vadd.f32 0.0, %v783
      %v785 = vpop.f32.mrb[0].mxu0
      %v786 = vpop.f32.mrb[0].mxu0
      %787 = vdwg.mxu0
      %v788 = vadd.f32 %v726, %v782
      %v789 = vadd.f32 %v727, %v784
      %s790 = scalar_lea.vmem [#allocation2], 48
      %791 = vst [vmem:[%s790] sm:$0xff] %v788
      %792 = vst [vmem:[%s790 + $0x8] sm:$0xff] %v789
      %v793 = vadd.f32 %v788, %v789
      %794 = vadd.xlane.f32.xlu0 %v793
      %v795 = vpop.xlane.xlu0 %794
      %v796 = vadd.f32 %v655, %v795
      %v797 = vmul.f32 %v796, 0.0009765625
      %v798 = vld [vmem:[#allocation2] sm:$0xff]
      %v799 = vld [vmem:[#allocation2 + $0x8] sm:$0xff]
      %v800 = vsub.f32 %v798, %v797
      %v801 = vsub.f32 %v799, %v797
      %v802 = vmul.f32 %v800, %v800
      %v803 = vmul.f32 %v801, %v801
      %v804 = vadd.f32 %v802, %v803
      %805 = vadd.xlane.f32.xlu0 %v804
      %v806 = vpop.xlane.xlu0 %805
      %v807 = vadd.f32 %v806, 0.0
      %v808 = vld [vmem:[%s507] sm:$0xff]
      %v809 = vld [vmem:[%s507 + $0x8] sm:$0xff]
      %v810 = vsub.f32 %v808, %v797
      %v811 = vsub.f32 %v809, %v797
      %v812 = vmul.f32 %v810, %v810
      %v813 = vmul.f32 %v811, %v811
      %v814 = vadd.f32 %v812, %v813
      %815 = vadd.xlane.f32.xlu0 %v814
      %v816 = vpop.xlane.xlu0 %815
      %v817 = vadd.f32 %v807, %v816
      %v818 = vld [vmem:[%s649] sm:$0xff]
      %v819 = vld [vmem:[%s649 + $0x8] sm:$0xff]
      %v820 = vsub.f32 %v818, %v797
      %v821 = vsub.f32 %v819, %v797
      %v822 = vmul.f32 %v820, %v820
      %v823 = vmul.f32 %v821, %v821
      %v824 = vadd.f32 %v822, %v823
      %825 = vadd.xlane.f32.xlu0 %v824
      %v826 = vpop.xlane.xlu0 %825
      %v827 = vadd.f32 %v817, %v826
      %v828 = vld [vmem:[%s790] sm:$0xff]
      %v829 = vld [vmem:[%s790 + $0x8] sm:$0xff]
      %v830 = vsub.f32 %v828, %v797
      %v831 = vsub.f32 %v829, %v797
      %v832 = vmul.f32 %v830, %v830
      %v833 = vmul.f32 %v831, %v831
      %v834 = vadd.f32 %v832, %v833
      %835 = vadd.xlane.f32.xlu0 %v834
      %v836 = vpop.xlane.xlu0 %835
      %v837 = vadd.f32 %v827, %v836
      %v838 = vmul.f32 %v837, 0.0009765625
      %v839 = vadd.f32 %v838, 1e-05
      %v840 = vrsqrt.pop %v839
      %v841 = vmul.f32 %v800, %v840
      %v842 = vmul.f32 %v801, %v840
      %v843 = vmax.f32 %v841, 0.0
      %v844 = vmax.f32 %v842, 0.0
      %v845 = vpack.c.bf16 %v843, %v843
      %v846 = vpack.c.bf16 %v844, %v844
      %v849 = vunpack.c.l.b16 %v845
      %v850 = vunpack.c.l.b16 %v846
      %v851 = vpack.c.b16 %v850, %v849
      %853 = vst [vmem:[%s226] sm:$0xff] %v851
      %v854 = vld [vmem:[%s507] sm:$0xff]
      %v855 = vld [vmem:[%s507 + $0x8] sm:$0xff]
      %v856 = vsub.f32 %v854, %v797
      %v857 = vsub.f32 %v855, %v797
      %v858 = vmul.f32 %v856, %v840
      %v859 = vmul.f32 %v857, %v840
      %v860 = vmax.f32 %v858, 0.0
      %v861 = vmax.f32 %v859, 0.0
      %v862 = vpack.c.bf16 %v860, %v860
      %v863 = vpack.c.bf16 %v861, %v861
      %v866 = vunpack.c.l.b16 %v862
      %v867 = vunpack.c.l.b16 %v863
      %v868 = vpack.c.b16 %v867, %v866
      %s870 = scalar_lea.vmem %s226, 8
      %871 = vst [vmem:[%s870] sm:$0xff] %v868
      %v872 = vld [vmem:[%s649] sm:$0xff]
      %v873 = vld [vmem:[%s649 + $0x8] sm:$0xff]
      %v874 = vsub.f32 %v872, %v797
      %v875 = vsub.f32 %v873, %v797
      %v876 = vmul.f32 %v874, %v840
      %v877 = vmul.f32 %v875, %v840
      %v878 = vmax.f32 %v876, 0.0
      %v879 = vmax.f32 %v877, 0.0
      %v880 = vpack.c.bf16 %v878, %v878
      %v881 = vpack.c.bf16 %v879, %v879
      %v884 = vunpack.c.l.b16 %v880
      %v885 = vunpack.c.l.b16 %v881
      %v886 = vpack.c.b16 %v885, %v884
      %s888 = scalar_lea.vmem %s226, 16
      %889 = vst [vmem:[%s888] sm:$0xff] %v886
      %v890 = vld [vmem:[%s790] sm:$0xff]
      %v891 = vld [vmem:[%s790 + $0x8] sm:$0xff]
      %v892 = vsub.f32 %v890, %v797
      %v893 = vsub.f32 %v891, %v797
      %v894 = vmul.f32 %v892, %v840
      %v895 = vmul.f32 %v893, %v840
      %v896 = vmax.f32 %v894, 0.0
      %v897 = vmax.f32 %v895, 0.0
      %v898 = vpack.c.bf16 %v896, %v896
      %v899 = vpack.c.bf16 %v897, %v897
      %v902 = vunpack.c.l.b16 %v898
      %v903 = vunpack.c.l.b16 %v899
      %v904 = vpack.c.b16 %v903, %v902
      %s906 = scalar_lea.vmem %s226, 24
      %907 = vst [vmem:[%s906] sm:$0xff] %v904
      %p908 = scmp.lt.s32.totalorder %s18, 1
      %s909 = scalar_select %p908, %s18, 1
      %p910 = scmp.lt.s32.totalorder %s19, 0
      %s911 = scalar_select %p910, %s19, 0
      %s912 = smul.addr %s911, 2
      %s913 = smul.addr %s909, 8
      %s914 = sadd.s32 %s912, %s913
      %s915 = smul.addr %s914, 4
      %s916 = scalar_lea.vmem %s3, %s915
      // Predicated region
      $region33: #{deconv_block.1} parent=31 // pred_check
        %p917 = pneg %p124
      $region34: #{deconv_block.1} parent=31 // pred_check_branch
        %919 = sbr.rel (%p917) target = $region36
      $region35: #{deconv_block.1} parent=31 // pred_region
        _
      $region36: #{deconv_block.1} parent=31 // pred_fallthru
        _
    $region32: #{deconv_block.1} parent=5 // pred_fallthru
      _
    %p920 = scmp.le.s32.totalorder 2, %s9
    // Predicated region
    $region37: #{deconv_block.1} parent=5 // pred_check
      %p921 = pneg %p920
    $region38: #{deconv_block.1} parent=5 // pred_check_branch
      %923 = sbr.rel (%p921) target = $region40
    $region39: #{deconv_block.1} parent=5 // pred_region
      %s924 = ssub.s32 %s9, 2
      // Predicated region
      $region41: #{deconv_block.1} parent=39 // pred_check
        %p925 = pneg %p130
      $region42: #{deconv_block.1} parent=39 // pred_check_branch
        %927 = sbr.rel (%p925) target = $region44
      $region43: #{deconv_block.1} parent=39 // pred_region
        %p928 = scmp.lt.s32.totalorder %s20, 1
        %s929 = scalar_select %p928, %s20, 1
        %p930 = scmp.lt.s32.totalorder %s21, 0
        %s931 = scalar_select %p930, %s21, 0
        %s932 = smul.addr %s931, 2
        %s933 = smul.addr %s929, 8
        %s934 = sadd.s32 %s932, %s933
        %s935 = smul.addr %s934, 4
        %s936 = scalar_lea.vmem %s3, %s935
      $region44: #{deconv_block.1} parent=39 // pred_fallthru
        _
    $region40: #{deconv_block.1} parent=5 // pred_fallthru
      _
  $region6: #{deconv_block.1} parent=0 // loop_footer
    %s13 = sadd.s32 1, %s9
  $region7: #{deconv_block.1} parent=0 // loop_footer_branch
    %8 = sbr.rel target = $region3
  $region8: #{deconv_block.1} parent=0 // loop_exit
    _

</llo_original>
